<compile_context>
chip_gen: v5e
topology: v5e:2x2
jax: 0.10.0
libtpu: 0.0.40
codegen_flags: <defaults>
</compile_context>

<pallas_src>
import jax
import jax.numpy as jnp
from jax.experimental import pallas as pl
from jax.experimental.pallas import tpu as pltpu

NEG_SLOPE = 0.01  # nn.LeakyReLU() default


def _round_up(x, m):
    return (x + m - 1) // m * m


def _leaky_relu(v):
    return jnp.where(v > 0, v, NEG_SLOPE * v)


def mlp_kernel(x_ref, w1_ref, b1_ref, w2_ref, b2_ref, w3_ref, b3_ref,
               w4_ref, b4_ref, out_ref):
    # x arrives as f32; the bf16 cast happens here (hides under the matmuls) so the
    # wrapper never does a separate XLA cast pass over x. All dots accumulate in f32.
    x = x_ref[...].astype(jnp.bfloat16)

    h = jnp.dot(x, w1_ref[...], preferred_element_type=jnp.float32) + b1_ref[...]
    h = _leaky_relu(h)

    h = jnp.dot(h.astype(jnp.bfloat16), w2_ref[...],
                preferred_element_type=jnp.float32) + b2_ref[...]
    h = _leaky_relu(h)

    h = jnp.dot(h.astype(jnp.bfloat16), w3_ref[...],
                preferred_element_type=jnp.float32) + b3_ref[...]
    h = _leaky_relu(h)

    logits = jnp.dot(h.astype(jnp.bfloat16), w4_ref[...],
                     preferred_element_type=jnp.float32) + b4_ref[...]

    # Numerically-stable softmax over the (lane-dense, 128-padded) class axis.
    # Padded lanes carry a -inf bias, so exp() of them is exactly 0 and the
    # normalization matches the unpadded softmax.
    m = jnp.max(logits, axis=1, keepdims=True)
    e = jnp.exp(logits - m)
    denom = jnp.sum(e, axis=1, keepdims=True)
    out_ref[...] = (e * pl.reciprocal(denom, approx=True)).astype(out_ref.dtype)


def prepare_params(params):
    """One-time device-side prep (hoisted off the forward hot path):
    cast weights to bf16, pad the class dim of w4/b4 to a multiple of 128
    (-inf bias in pad lanes so softmax over real lanes is unchanged)."""
    num_classes = params["w4"].shape[1]
    c_pad = _round_up(num_classes, 128)
    w4 = params["w4"]
    b4 = params["b4"]
    if c_pad != num_classes:
        w4 = jnp.pad(w4, ((0, 0), (0, c_pad - num_classes)))
        b4 = jnp.pad(b4, ((0, 0), (0, c_pad - num_classes)),
                     constant_values=-jnp.inf)
    return dict(
        w1=params["w1"].astype(jnp.bfloat16), b1=params["b1"].astype(jnp.float32),
        w2=params["w2"].astype(jnp.bfloat16), b2=params["b2"].astype(jnp.float32),
        w3=params["w3"].astype(jnp.bfloat16), b3=params["b3"].astype(jnp.float32),
        w4=w4.astype(jnp.bfloat16), b4=b4.astype(jnp.float32),
        num_classes=num_classes,  # static Python int (used only for final trim)
    )


def mlp_classifier_forward(x, prepared, *, batch_tile=1024,
                           out_dtype=jnp.bfloat16, trim=True):
    """x: [B, input_size] float32. `prepared` comes from prepare_params()."""
    B, in_dim = x.shape
    hidden = prepared["w1"].shape[1]
    c_pad = prepared["w4"].shape[1]
    num_classes = prepared["num_classes"]

    # --- pick the batch tile (cap 2048) and pad the batch to a multiple of it ----
    # Multiples of 16 satisfy the bf16 (16,128) sublane tiling as well as f32 (8,128).
    bt = min(min(batch_tile, 2048), _round_up(B, 16))
    bt = max(16, _round_up(bt, 16))
    # v7x has 2 TensorCores and only the grid axis can be sharded across them:
    # for big batches make sure there are at least 2 grid steps. On 1-TC chips the
    # extra step costs ~0.35us, i.e. noise.
    if _round_up(B, bt) // bt == 1 and B >= 512:
        bt = max(16, _round_up((B + 1) // 2, 16))
    b_pad = _round_up(B, bt)
    if b_pad != B:
        x = jnp.pad(x, ((0, b_pad - B), (0, 0)))

    w1, b1 = prepared["w1"], prepared["b1"]
    w2, b2 = prepared["w2"], prepared["b2"]
    w3, b3 = prepared["w3"], prepared["b3"]
    w4, b4 = prepared["w4"], prepared["b4"]

    grid = (b_pad // bt,)

    # Weights/biases: constant index_map -> block is resident, not re-DMA'd per step.
    rep = lambda shape: pl.BlockSpec(shape, lambda i: (0, 0))

    out_itemsize = jnp.dtype(out_dtype).itemsize
    flops = 2 * b_pad * (in_dim * hidden + 2 * hidden * hidden + hidden * c_pad)
    bytes_accessed = (
        b_pad * in_dim * 4                                   # x (f32 read)
        + (w1.size + w2.size + w3.size + w4.size) * 2        # bf16 weights
        + (b1.size + b2.size + b3.size + b4.size) * 4        # f32 biases
        + b_pad * c_pad * out_itemsize)                      # output writeback
    cost = pl.CostEstimate(flops=flops,
                           transcendentals=b_pad * c_pad,
                           bytes_accessed=int(bytes_accessed))

    out = pl.pallas_call(
        mlp_kernel,
        out_shape=jax.ShapeDtypeStruct((b_pad, c_pad), out_dtype),
        grid_spec=pltpu.PrefetchScalarGridSpec(
            num_scalar_prefetch=0,
            grid=grid,
            in_specs=[
                pl.BlockSpec((bt, in_dim), lambda i: (i, 0)),   # x  (f32, cast in-kernel)
                rep((in_dim, hidden)),                          # w1 (bf16)
                rep((1, hidden)),                               # b1 (f32)
                rep((hidden, hidden)),                          # w2 (bf16)
                rep((1, hidden)),                               # b2 (f32)
                rep((hidden, hidden)),                          # w3 (bf16)
                rep((1, hidden)),                               # b3 (f32)
                rep((hidden, c_pad)),                           # w4 (bf16, class-padded)
                rep((1, c_pad)),                                # b4 (f32, -inf pad lanes)
            ],
            out_specs=pl.BlockSpec((bt, c_pad), lambda i: (i, 0)),
        ),
        compiler_params=pltpu.CompilerParams(
            dimension_semantics=("parallel",),
            vmem_limit_bytes=32 * 1024 * 1024,   # covers v5e's 16 MiB default at big tiles
        ),
        cost_estimate=cost,
    )(x, w1, b1, w2, b2, w3, b3, w4, b4)

    if trim:
        # For large-batch pipelines prefer trim=False and keep the padded, lane-dense
        # layout end-to-end (avoids an extra full read/relayout of the output).
        return out[:B, :num_classes]
    return out


def init_params(key, input_size, num_classes, hidden=128):
    """Deterministic synthetic params; stored as [in, out] (PyTorch W transposed)."""
    def linear(k, fan_in, fan_out):
        kw, kb = jax.random.split(k)
        bound = 1.0 / jnp.sqrt(fan_in)
        w = jax.random.uniform(kw, (fan_in, fan_out), jnp.float32, -bound, bound)
        b = jax.random.uniform(kb, (1, fan_out), jnp.float32, -bound, bound)
        return w, b

    k1, k2, k3, k4 = jax.random.split(key, 4)
    w1, b1 = linear(k1, input_size, hidden)
    w2, b2 = linear(k2, hidden, hidden)
    w3, b3 = linear(k3, hidden, hidden)
    w4, b4 = linear(k4, hidden, num_classes)
    return dict(w1=w1, b1=b1, w2=w2, b2=b2, w3=w3, b3=b3, w4=w4, b4=b4)


def ref_forward(x, p):
    """Pure-JAX reference with the same bf16-operand / f32-accumulate recipe."""
    h = x.astype(jnp.bfloat16)
    for wi, bi in (("w1", "b1"), ("w2", "b2"), ("w3", "b3")):
        z = jnp.dot(h, p[wi].astype(jnp.bfloat16),
                    preferred_element_type=jnp.float32) + p[bi]
        h = _leaky_relu(z).astype(jnp.bfloat16)
    logits = jnp.dot(h, p["w4"].astype(jnp.bfloat16),
                     preferred_element_type=jnp.float32) + p["b4"]
    return jax.nn.softmax(logits, axis=1)


if __name__ == "__main__":
    key = jax.random.PRNGKey(0)
    kx, kp = jax.random.split(key)

    # Batch deliberately not a multiple of the tile to exercise the padding path.
    batch, input_size, num_classes = 13, 32, 10
    x = jax.random.normal(kx, (batch, input_size), dtype=jnp.float32)
    params = init_params(kp, input_size, num_classes)

    # One-time weight prep (bf16 cast + class-dim pad), off the per-call hot path.
    prepared = prepare_params(params)
    forward = jax.jit(lambda xb: mlp_classifier_forward(xb, prepared))

    out = jax.block_until_ready(forward(x))

    ref_out = ref_forward(x, params)
    assert out.shape == (batch, num_classes)
    out_f32 = out.astype(jnp.float32)
    max_err = float(jnp.max(jnp.abs(out_f32 - ref_out)))
    # bf16 output + approx reciprocal -> ~1e-2 tolerance on probabilities.
    assert max_err < 1e-2, max_err
    assert jnp.allclose(jnp.sum(out_f32, axis=1), 1.0, atol=2.5e-2)
    print("KERNEL_OK")
</pallas_src>

<mosaic_0001>
module attributes {stable_mosaic.version = 11 : i64} {
  func.func @mlp_kernel(%arg0: i32, %arg1: memref<16x32xf32, #tpu.memory_space<vmem>>, %arg2: memref<32x128xbf16, #tpu.memory_space<vmem>>, %arg3: memref<1x128xf32, #tpu.memory_space<vmem>>, %arg4: memref<128x128xbf16, #tpu.memory_space<vmem>>, %arg5: memref<1x128xf32, #tpu.memory_space<vmem>>, %arg6: memref<128x128xbf16, #tpu.memory_space<vmem>>, %arg7: memref<1x128xf32, #tpu.memory_space<vmem>>, %arg8: memref<128x128xbf16, #tpu.memory_space<vmem>>, %arg9: memref<1x128xf32, #tpu.memory_space<vmem>>, %arg10: memref<16x128xbf16, #tpu.memory_space<vmem>>) attributes {dimension_semantics = [#tpu.dimension_semantics<parallel>], iteration_bounds = array<i64: 1>, scalar_prefetch = 0 : i64, scratch_operands = 0 : i64, tpu.core_type = #tpu.core_type<tc>, window_params = [{transform_indices = @transform_0, window_bounds = array<i64: 16, 32>}, {pipeline_mode = #tpu.pipeline_mode<synchronous>, transform_indices = @transform_1, window_bounds = array<i64: 32, 128>}, {pipeline_mode = #tpu.pipeline_mode<synchronous>, transform_indices = @transform_2, window_bounds = array<i64: 1, 128>}, {pipeline_mode = #tpu.pipeline_mode<synchronous>, transform_indices = @transform_3, window_bounds = array<i64: 128, 128>}, {pipeline_mode = #tpu.pipeline_mode<synchronous>, transform_indices = @transform_4, window_bounds = array<i64: 1, 128>}, {pipeline_mode = #tpu.pipeline_mode<synchronous>, transform_indices = @transform_5, window_bounds = array<i64: 128, 128>}, {pipeline_mode = #tpu.pipeline_mode<synchronous>, transform_indices = @transform_6, window_bounds = array<i64: 1, 128>}, {pipeline_mode = #tpu.pipeline_mode<synchronous>, transform_indices = @transform_7, window_bounds = array<i64: 128, 128>}, {pipeline_mode = #tpu.pipeline_mode<synchronous>, transform_indices = @transform_8, window_bounds = array<i64: 1, 128>}, {transform_indices = @transform_9, window_bounds = array<i64: 16, 128>}]} {
    %c0 = arith.constant 0 : index
    %c0_0 = arith.constant 0 : index
    %0 = vector.load %arg1[%c0, %c0_0] : memref<16x32xf32, #tpu.memory_space<vmem>>, vector<16x32xf32>
    %1 = arith.truncf %0 : vector<16x32xf32> to vector<16x32xbf16>
    %c0_1 = arith.constant 0 : index
    %c0_2 = arith.constant 0 : index
    %2 = vector.load %arg2[%c0_1, %c0_2] : memref<32x128xbf16, #tpu.memory_space<vmem>>, vector<32x128xbf16>
    %cst = arith.constant dense<0.000000e+00> : vector<16x128xf32>
    %3 = tpu.matmul %1, %2, %cst {dimension_numbers = #tpu.dot_dimension_numbers<[1], [0], [0], [1], [0, 0, 1, 1], [], []>} : vector<16x32xbf16>, vector<32x128xbf16>, vector<16x128xf32> -> vector<16x128xf32>
    %c0_3 = arith.constant 0 : index
    %c0_4 = arith.constant 0 : index
    %4 = vector.load %arg3[%c0_3, %c0_4] : memref<1x128xf32, #tpu.memory_space<vmem>>, vector<1x128xf32>
    %5 = vector.broadcast %4 : vector<1x128xf32> to vector<16x128xf32>
    %6 = arith.addf %3, %5 : vector<16x128xf32>
    %cst_5 = arith.constant 0.000000e+00 : f32
    %7 = vector.broadcast %cst_5 : f32 to vector<16x128xf32>
    %8 = arith.cmpf ogt, %6, %7 : vector<16x128xf32>
    %cst_6 = arith.constant 0.00999999977 : f32
    %9 = vector.broadcast %cst_6 : f32 to vector<16x128xf32>
    %10 = arith.mulf %9, %6 : vector<16x128xf32>
    %11 = arith.select %8, %6, %10 : vector<16x128xi1>, vector<16x128xf32>
    %12 = arith.truncf %11 : vector<16x128xf32> to vector<16x128xbf16>
    %c0_7 = arith.constant 0 : index
    %c0_8 = arith.constant 0 : index
    %13 = vector.load %arg4[%c0_7, %c0_8] : memref<128x128xbf16, #tpu.memory_space<vmem>>, vector<128x128xbf16>
    %cst_9 = arith.constant dense<0.000000e+00> : vector<16x128xf32>
    %14 = tpu.matmul %12, %13, %cst_9 {dimension_numbers = #tpu.dot_dimension_numbers<[1], [0], [0], [1], [0, 0, 1, 1], [], []>} : vector<16x128xbf16>, vector<128x128xbf16>, vector<16x128xf32> -> vector<16x128xf32>
    %c0_10 = arith.constant 0 : index
    %c0_11 = arith.constant 0 : index
    %15 = vector.load %arg5[%c0_10, %c0_11] : memref<1x128xf32, #tpu.memory_space<vmem>>, vector<1x128xf32>
    %16 = vector.broadcast %15 : vector<1x128xf32> to vector<16x128xf32>
    %17 = arith.addf %14, %16 : vector<16x128xf32>
    %cst_12 = arith.constant 0.000000e+00 : f32
    %18 = vector.broadcast %cst_12 : f32 to vector<16x128xf32>
    %19 = arith.cmpf ogt, %17, %18 : vector<16x128xf32>
    %cst_13 = arith.constant 0.00999999977 : f32
    %20 = vector.broadcast %cst_13 : f32 to vector<16x128xf32>
    %21 = arith.mulf %20, %17 : vector<16x128xf32>
    %22 = arith.select %19, %17, %21 : vector<16x128xi1>, vector<16x128xf32>
    %23 = arith.truncf %22 : vector<16x128xf32> to vector<16x128xbf16>
    %c0_14 = arith.constant 0 : index
    %c0_15 = arith.constant 0 : index
    %24 = vector.load %arg6[%c0_14, %c0_15] : memref<128x128xbf16, #tpu.memory_space<vmem>>, vector<128x128xbf16>
    %cst_16 = arith.constant dense<0.000000e+00> : vector<16x128xf32>
    %25 = tpu.matmul %23, %24, %cst_16 {dimension_numbers = #tpu.dot_dimension_numbers<[1], [0], [0], [1], [0, 0, 1, 1], [], []>} : vector<16x128xbf16>, vector<128x128xbf16>, vector<16x128xf32> -> vector<16x128xf32>
    %c0_17 = arith.constant 0 : index
    %c0_18 = arith.constant 0 : index
    %26 = vector.load %arg7[%c0_17, %c0_18] : memref<1x128xf32, #tpu.memory_space<vmem>>, vector<1x128xf32>
    %27 = vector.broadcast %26 : vector<1x128xf32> to vector<16x128xf32>
    %28 = arith.addf %25, %27 : vector<16x128xf32>
    %cst_19 = arith.constant 0.000000e+00 : f32
    %29 = vector.broadcast %cst_19 : f32 to vector<16x128xf32>
    %30 = arith.cmpf ogt, %28, %29 : vector<16x128xf32>
    %cst_20 = arith.constant 0.00999999977 : f32
    %31 = vector.broadcast %cst_20 : f32 to vector<16x128xf32>
    %32 = arith.mulf %31, %28 : vector<16x128xf32>
    %33 = arith.select %30, %28, %32 : vector<16x128xi1>, vector<16x128xf32>
    %34 = arith.truncf %33 : vector<16x128xf32> to vector<16x128xbf16>
    %c0_21 = arith.constant 0 : index
    %c0_22 = arith.constant 0 : index
    %35 = vector.load %arg8[%c0_21, %c0_22] : memref<128x128xbf16, #tpu.memory_space<vmem>>, vector<128x128xbf16>
    %cst_23 = arith.constant dense<0.000000e+00> : vector<16x128xf32>
    %36 = tpu.matmul %34, %35, %cst_23 {dimension_numbers = #tpu.dot_dimension_numbers<[1], [0], [0], [1], [0, 0, 1, 1], [], []>} : vector<16x128xbf16>, vector<128x128xbf16>, vector<16x128xf32> -> vector<16x128xf32>
    %c0_24 = arith.constant 0 : index
    %c0_25 = arith.constant 0 : index
    %37 = vector.load %arg9[%c0_24, %c0_25] : memref<1x128xf32, #tpu.memory_space<vmem>>, vector<1x128xf32>
    %38 = vector.broadcast %37 : vector<1x128xf32> to vector<16x128xf32>
    %39 = arith.addf %36, %38 : vector<16x128xf32>
    %cst_26 = arith.constant dense<0xFF800000> : vector<16xf32>
    %40 = vector.multi_reduction <maximumf>, %39, %cst_26 [1] : vector<16x128xf32> to vector<16xf32>
    %41 = vector.shape_cast %40 : vector<16xf32> to vector<16x1xf32>
    %42 = vector.broadcast %41 : vector<16x1xf32> to vector<16x128xf32>
    %43 = arith.subf %39, %42 : vector<16x128xf32>
    %44 = math.exp %43 : vector<16x128xf32>
    %cst_27 = arith.constant dense<0.000000e+00> : vector<16xf32>
    %45 = vector.multi_reduction <add>, %44, %cst_27 [1] : vector<16x128xf32> to vector<16xf32>
    %46 = vector.shape_cast %45 : vector<16xf32> to vector<16x1xf32>
    %47 = tpu.reciprocal %46 {approx = true} : vector<16x1xf32> -> vector<16x1xf32>
    %48 = vector.broadcast %47 : vector<16x1xf32> to vector<16x128xf32>
    %49 = arith.mulf %44, %48 : vector<16x128xf32>
    %50 = arith.truncf %49 : vector<16x128xf32> to vector<16x128xbf16>
    %c0_28 = arith.constant 0 : index
    %c0_29 = arith.constant 0 : index
    %51 = vector.load %arg10[%c0_28, %c0_29] : memref<16x128xbf16, #tpu.memory_space<vmem>>, vector<16x128xbf16>
    tpu.vector_store %arg10[%c0_28, %c0_29], %50 {strides = array<i32>} : memref<16x128xbf16, #tpu.memory_space<vmem>>, vector<16x128xbf16>,
    return
  }
  func.func @transform_0(%arg0: i32) -> (i32, i32) {
    %c0_i32 = arith.constant 0 : i32
    %c0_i32_0 = arith.constant 0 : i32
    return %arg0, %c0_i32 : i32, i32
  }
  func.func @transform_1(%arg0: i32) -> (i32, i32) {
    %c0_i32 = arith.constant 0 : i32
    %c0_i32_0 = arith.constant 0 : i32
    %c0_i32_1 = arith.constant 0 : i32
    return %c0_i32, %c0_i32_0 : i32, i32
  }
  func.func @transform_2(%arg0: i32) -> (i32, i32) {
    %c0_i32 = arith.constant 0 : i32
    %c0_i32_0 = arith.constant 0 : i32
    %c0_i32_1 = arith.constant 0 : i32
    return %c0_i32, %c0_i32_0 : i32, i32
  }
  func.func @transform_3(%arg0: i32) -> (i32, i32) {
    %c0_i32 = arith.constant 0 : i32
    %c0_i32_0 = arith.constant 0 : i32
    %c0_i32_1 = arith.constant 0 : i32
    return %c0_i32, %c0_i32_0 : i32, i32
  }
  func.func @transform_4(%arg0: i32) -> (i32, i32) {
    %c0_i32 = arith.constant 0 : i32
    %c0_i32_0 = arith.constant 0 : i32
    %c0_i32_1 = arith.constant 0 : i32
    return %c0_i32, %c0_i32_0 : i32, i32
  }
  func.func @transform_5(%arg0: i32) -> (i32, i32) {
    %c0_i32 = arith.constant 0 : i32
    %c0_i32_0 = arith.constant 0 : i32
    %c0_i32_1 = arith.constant 0 : i32
    return %c0_i32, %c0_i32_0 : i32, i32
  }
  func.func @transform_6(%arg0: i32) -> (i32, i32) {
    %c0_i32 = arith.constant 0 : i32
    %c0_i32_0 = arith.constant 0 : i32
    %c0_i32_1 = arith.constant 0 : i32
    return %c0_i32, %c0_i32_0 : i32, i32
  }
  func.func @transform_7(%arg0: i32) -> (i32, i32) {
    %c0_i32 = arith.constant 0 : i32
    %c0_i32_0 = arith.constant 0 : i32
    %c0_i32_1 = arith.constant 0 : i32
    return %c0_i32, %c0_i32_0 : i32, i32
  }
  func.func @transform_8(%arg0: i32) -> (i32, i32) {
    %c0_i32 = arith.constant 0 : i32
    %c0_i32_0 = arith.constant 0 : i32
    %c0_i32_1 = arith.constant 0 : i32
    return %c0_i32, %c0_i32_0 : i32, i32
  }
  func.func @transform_9(%arg0: i32) -> (i32, i32) {
    %c0_i32 = arith.constant 0 : i32
    %c0_i32_0 = arith.constant 0 : i32
    return %arg0, %c0_i32 : i32, i32
  }
}

</mosaic_0001>

<llo_original>
// kernel: _lambda_.1
$region0: #{_lambda_.1}
  #allocation0 [shape = 'u32[]', space=smem, size = 0x4, offset = 0x4, fixed_abs, tag = 'smem constant byte address 0x4 - core index']
  #allocation1 [shape = 'u32[72,128]{1,0:T(1,128)}', space=vmem, size = 0x9000, scoped, tag = 'internal scratch']
  %s0 = inlined_call_operand.vmem [shape: f32[16,32], index: 0, kind: input, shape index: {}]
  %s1 = inlined_call_operand.vmem [shape: bf16[32,128], index: 1, kind: input, shape index: {}]
  %s2 = inlined_call_operand.vmem [shape: f32[1,128], index: 2, kind: input, shape index: {}]
  %s3 = inlined_call_operand.hbm [shape: bf16[128,128], index: 3, kind: input, shape index: {}]
  %s4 = inlined_call_operand.vmem [shape: f32[1,128], index: 4, kind: input, shape index: {}]
  %s5 = inlined_call_operand.hbm [shape: bf16[128,128], index: 5, kind: input, shape index: {}]
  %s6 = inlined_call_operand.vmem [shape: f32[1,128], index: 6, kind: input, shape index: {}]
  %s7 = inlined_call_operand.hbm [shape: bf16[128,128], index: 7, kind: input, shape index: {}]
  %s8 = inlined_call_operand.vmem [shape: f32[1,128], index: 8, kind: input, shape index: {}]
  %s9 = inlined_call_operand.hbm [shape: bf16[16,128], index: 9, kind: output, shape index: {}]
  %s10 = sld [smem:[#allocation0]]
  $region58: #{_lambda_.1} parent=0
    _
  %s12 = ssub.s32 1, %s10
  %s13 = scalar_select 0, %s12, %s10
  $region1: #{_lambda_.1} parent=0
    #allocation2 [shape = 'u8[32768]{0}', space=vmem, size = 0x8000, scoped, tag = 'input window, operand 3, single buffered']
    #allocation3 [shape = 's32[1]{0}', space=sflag, size = 0x4, scoped, tag = 'scoped memory for _lambda_.1']
    #allocation4 [shape = 's32[1]{0}', space=sflag, size = 0x4, scoped, tag = 'scoped memory for _lambda_.1']
    #allocation5 [shape = 'u8[32768]{0}', space=vmem, size = 0x8000, scoped, tag = 'input window, operand 5, single buffered']
    #allocation6 [shape = 's32[1]{0}', space=sflag, size = 0x4, scoped, tag = 'scoped memory for _lambda_.1']
    #allocation7 [shape = 'u8[32768]{0}', space=vmem, size = 0x8000, scoped, tag = 'input window, operand 7, single buffered']
    #allocation8 [shape = 'u8[4096]{0}', space=vmem, size = 0x1000, scoped, tag = 'output window, operand 0, single buffered']
    %14 = vsyncpa [#allocation3], 0
    %15 = vsyncpa [#allocation6], 0
    %16 = vsyncpa [#allocation4], 0
    // Predicated region
    $region2: #{_lambda_.1} parent=1 // pred_check
      _
    $region3: #{_lambda_.1} parent=1 // pred_check_branch
      %18 = sbr.rel (0) target = $region5
    $region4: #{_lambda_.1} parent=1 // pred_region
      _
    $region5: #{_lambda_.1} parent=1 // pred_fallthru
      _
    // Predicated region
    $region6: #{_lambda_.1} parent=1 // pred_check
      _
    $region7: #{_lambda_.1} parent=1 // pred_check_branch
      %20 = sbr.rel (0) target = $region9
    $region8: #{_lambda_.1} parent=1 // pred_region
      _
    $region9: #{_lambda_.1} parent=1 // pred_fallthru
      _
    // Predicated region
    $region10: #{_lambda_.1} parent=1 // pred_check
      _
    $region11: #{_lambda_.1} parent=1 // pred_check_branch
      %22 = sbr.rel (0) target = $region13
    $region12: #{_lambda_.1} parent=1 // pred_region
      _
    $region13: #{_lambda_.1} parent=1 // pred_fallthru
      _
    // Predicated region
    $region14: #{_lambda_.1} parent=1 // pred_check
      _
    $region15: #{_lambda_.1} parent=1 // pred_check_branch
      %24 = sbr.rel (0) target = $region17
    $region16: #{_lambda_.1} parent=1 // pred_region
      %26 = vsyncadd [#allocation3], 0
      %s27 = sshll.u32 %s3, 4
      %s28 = int_to_ptr.hbm [resolvable:$true] %s27
      %s29 = sshll.u32 [#allocation2], 4
      %s30 = int_to_ptr.vmem [resolvable:$true] %s29
      %35 = dma.hbm_to_vmem [thread:$0]  %s28, 1024, %s30, [#allocation3], 64, 64, 4
    $region17: #{_lambda_.1} parent=1 // pred_fallthru
      _
    // Predicated region
    $region18: #{_lambda_.1} parent=1 // pred_check
      _
    $region19: #{_lambda_.1} parent=1 // pred_check_branch
      %37 = sbr.rel (0) target = $region21
    $region20: #{_lambda_.1} parent=1 // pred_region
      _
    $region21: #{_lambda_.1} parent=1 // pred_fallthru
      _
    // Predicated region
    $region22: #{_lambda_.1} parent=1 // pred_check
      _
    $region23: #{_lambda_.1} parent=1 // pred_check_branch
      %39 = sbr.rel (0) target = $region25
    $region24: #{_lambda_.1} parent=1 // pred_region
      %41 = vsyncadd [#allocation6], 0
      %s42 = sshll.u32 %s5, 4
      %s43 = int_to_ptr.hbm [resolvable:$true] %s42
      %s44 = sshll.u32 [#allocation5], 4
      %s45 = int_to_ptr.vmem [resolvable:$true] %s44
      %50 = dma.hbm_to_vmem [thread:$0]  %s43, 1024, %s45, [#allocation6], 64, 64, 4
    $region25: #{_lambda_.1} parent=1 // pred_fallthru
      _
    // Predicated region
    $region26: #{_lambda_.1} parent=1 // pred_check
      _
    $region27: #{_lambda_.1} parent=1 // pred_check_branch
      %52 = sbr.rel (0) target = $region29
    $region28: #{_lambda_.1} parent=1 // pred_region
      _
    $region29: #{_lambda_.1} parent=1 // pred_fallthru
      _
    // Predicated region
    $region30: #{_lambda_.1} parent=1 // pred_check
      _
    $region31: #{_lambda_.1} parent=1 // pred_check_branch
      %54 = sbr.rel (0) target = $region33
    $region32: #{_lambda_.1} parent=1 // pred_region
      %56 = vsyncadd [#allocation6], 0
      %s57 = sshll.u32 %s7, 4
      %s58 = int_to_ptr.hbm [resolvable:$true] %s57
      %s59 = sshll.u32 [#allocation7], 4
      %s60 = int_to_ptr.vmem [resolvable:$true] %s59
      %65 = dma.hbm_to_vmem [thread:$0]  %s58, 1024, %s60, [#allocation6], 64, 64, 4
    $region33: #{_lambda_.1} parent=1 // pred_fallthru
      _
    // Predicated region
    $region34: #{_lambda_.1} parent=1 // pred_check
      _
    $region35: #{_lambda_.1} parent=1 // pred_check_branch
      %67 = sbr.rel (0) target = $region37
    $region36: #{_lambda_.1} parent=1 // pred_region
      _
    $region37: #{_lambda_.1} parent=1 // pred_fallthru
      _
    // Predicated region
    $region38: #{_lambda_.1} parent=1 // pred_check
      _
    $region39: #{_lambda_.1} parent=1 // pred_check_branch
      %69 = sbr.rel (0) target = $region41
    $region40: #{_lambda_.1} parent=1 // pred_region
      %71 = dma.done [#allocation3], 1024
    $region41: #{_lambda_.1} parent=1 // pred_fallthru
      _
    // Predicated region
    $region42: #{_lambda_.1} parent=1 // pred_check
      _
    $region43: #{_lambda_.1} parent=1 // pred_check_branch
      %73 = sbr.rel (0) target = $region45
    $region44: #{_lambda_.1} parent=1 // pred_region
      %75 = dma.done [#allocation6], 1024
    $region45: #{_lambda_.1} parent=1 // pred_fallthru
      _
    // Predicated region
    $region46: #{_lambda_.1} parent=1 // pred_check
      _
    $region47: #{_lambda_.1} parent=1 // pred_check_branch
      %77 = sbr.rel (0) target = $region49
    $region48: #{_lambda_.1} parent=1 // pred_region
      %79 = dma.done [#allocation6], 1024
    $region49: #{_lambda_.1} parent=1 // pred_fallthru
      _
    %v81 = vld [vmem:[%s0] sm:$0xff]
    %v82 = vld [vmem:[%s0 + $0x8] sm:$0xff]
    %v83 = vpack.c.bf16 %v82, %v81
    %v84 = vld [vmem:[%s1] sm:$0xf]
    %v85 = vld [vmem:[%s1 + $0x4] sm:$0xf]
    %v86 = vld [vmem:[%s1 + $0x8] sm:$0xf]
    %v87 = vld [vmem:[%s1 + $0xc] sm:$0xf]
    %v88 = vld [vmem:[%s2] sm:$0x1]
    %v90 = vperm.slane %v88, 0
    %v96 = vunpack.c.l.b16 %v84
    %v97 = vunpack.c.l.b16 %v85
    %v98 = vunpack.c.l.b16 %v86
    %v99 = vunpack.c.l.b16 %v87
    %v100 = vpack.c.b16 %v97, %v96
    %v101 = vpack.c.b16 %v99, %v98
    %vm104 = vcmask 261120
    %v106 = vsel %vm104, %v83, 0
    %108 = vmatpush.bf16.msra.mxu0 0
    %109 = vmatpush.bf16.msra.mxu0 0
    %110 = vmatpush.bf16.msra.mxu0 0
    %111 = vmatpush.bf16.msra.mxu0 0
    %112 = vmatpush.bf16.msra.mxu0 0
    %113 = vmatpush.bf16.msra.mxu0 0
    %114 = vmatpush.bf16.msra.mxu0 %v101
    %115 = vmatpush.bf16.msra.mxu0 %v100
    %116 = vmatmul.bf16.gmra.mxu0 %v106
    %v117 = vpop.f32.mrf.mxu0
    %v118 = vadd.f32 %v90, %v117
    %v119 = vpop.f32.mrf.mxu0
    %v120 = vadd.f32 %v90, %v119
    %121 = vdwg.mxu0
    %vm122 = vcmp.gt.f32.partialorder %v118, 0.0
    %vm123 = vcmp.gt.f32.partialorder %v120, 0.0
    %v124 = vmul.f32 %v118, 0.01
    %v125 = vmul.f32 %v120, 0.01
    %v126 = vsel %vm122, %v118, %v124
    %v127 = vsel %vm123, %v120, %v125
    %v128 = vpack.c.bf16 %v127, %v126
    %v129 = vld [vmem:[#allocation2] sm:$0xf]
    %v130 = vld [vmem:[#allocation2 + $0x4] sm:$0xf]
    %v131 = vld [vmem:[#allocation2 + $0x8] sm:$0xf]
    %v132 = vld [vmem:[#allocation2 + $0xc] sm:$0xf]
    %v133 = vld [vmem:[#allocation2 + $0x10] sm:$0xf]
    %v134 = vld [vmem:[#allocation2 + $0x14] sm:$0xf]
    %v135 = vld [vmem:[#allocation2 + $0x18] sm:$0xf]
    %v136 = vld [vmem:[#allocation2 + $0x1c] sm:$0xf]
    %v137 = vld [vmem:[#allocation2 + $0x20] sm:$0xf]
    %v138 = vld [vmem:[#allocation2 + $0x24] sm:$0xf]
    %v139 = vld [vmem:[#allocation2 + $0x28] sm:$0xf]
    %v140 = vld [vmem:[#allocation2 + $0x2c] sm:$0xf]
    %v141 = vld [vmem:[#allocation2 + $0x30] sm:$0xf]
    %v142 = vld [vmem:[#allocation2 + $0x34] sm:$0xf]
    %v143 = vld [vmem:[#allocation2 + $0x38] sm:$0xf]
    %v144 = vld [vmem:[#allocation2 + $0x3c] sm:$0xf]
    %v145 = vld [vmem:[%s4] sm:$0x1]
    %v147 = vperm.slane %v145, 0
    %v165 = vunpack.c.l.b16 %v129
    %v166 = vunpack.c.l.b16 %v130
    %v167 = vunpack.c.l.b16 %v131
    %v168 = vunpack.c.l.b16 %v132
    %v169 = vunpack.c.l.b16 %v133
    %v170 = vunpack.c.l.b16 %v134
    %v171 = vunpack.c.l.b16 %v135
    %v172 = vunpack.c.l.b16 %v136
    %v173 = vunpack.c.l.b16 %v137
    %v174 = vunpack.c.l.b16 %v138
    %v175 = vunpack.c.l.b16 %v139
    %v176 = vunpack.c.l.b16 %v140
    %v177 = vunpack.c.l.b16 %v141
    %v178 = vunpack.c.l.b16 %v142
    %v179 = vunpack.c.l.b16 %v143
    %v180 = vunpack.c.l.b16 %v144
    %v181 = vpack.c.b16 %v166, %v165
    %v182 = vpack.c.b16 %v168, %v167
    %v183 = vpack.c.b16 %v170, %v169
    %v184 = vpack.c.b16 %v172, %v171
    %v185 = vpack.c.b16 %v174, %v173
    %v186 = vpack.c.b16 %v176, %v175
    %v187 = vpack.c.b16 %v178, %v177
    %v188 = vpack.c.b16 %v180, %v179
    %197 = vmatpush.bf16.msra.mxu0 %v188
    %198 = vmatpush.bf16.msra.mxu0 %v187
    %199 = vmatpush.bf16.msra.mxu0 %v186
    %200 = vmatpush.bf16.msra.mxu0 %v185
    %201 = vmatpush.bf16.msra.mxu0 %v184
    %202 = vmatpush.bf16.msra.mxu0 %v183
    %203 = vmatpush.bf16.msra.mxu0 %v182
    %204 = vmatpush.bf16.msra.mxu0 %v181
    %205 = vmatmul.bf16.gmra.mxu0 %v128
    %v206 = vpop.f32.mrf.mxu0
    %v207 = vadd.f32 %v147, %v206
    %v208 = vpop.f32.mrf.mxu0
    %v209 = vadd.f32 %v147, %v208
    %210 = vdwg.mxu0
    %vm211 = vcmp.gt.f32.partialorder %v207, 0.0
    %vm212 = vcmp.gt.f32.partialorder %v209, 0.0
    %v213 = vmul.f32 %v207, 0.01
    %v214 = vmul.f32 %v209, 0.01
    %v215 = vsel %vm211, %v207, %v213
    %v216 = vsel %vm212, %v209, %v214
    %v217 = vpack.c.bf16 %v216, %v215
    %v218 = vld [vmem:[#allocation5] sm:$0xf]
    %v219 = vld [vmem:[#allocation5 + $0x4] sm:$0xf]
    %v220 = vld [vmem:[#allocation5 + $0x8] sm:$0xf]
    %v221 = vld [vmem:[#allocation5 + $0xc] sm:$0xf]
    %v222 = vld [vmem:[#allocation5 + $0x10] sm:$0xf]
    %v223 = vld [vmem:[#allocation5 + $0x14] sm:$0xf]
    %v224 = vld [vmem:[#allocation5 + $0x18] sm:$0xf]
    %v225 = vld [vmem:[#allocation5 + $0x1c] sm:$0xf]
    %v226 = vld [vmem:[#allocation5 + $0x20] sm:$0xf]
    %v227 = vld [vmem:[#allocation5 + $0x24] sm:$0xf]
    %v228 = vld [vmem:[#allocation5 + $0x28] sm:$0xf]
    %v229 = vld [vmem:[#allocation5 + $0x2c] sm:$0xf]
    %v230 = vld [vmem:[#allocation5 + $0x30] sm:$0xf]
    %v231 = vld [vmem:[#allocation5 + $0x34] sm:$0xf]
    %v232 = vld [vmem:[#allocation5 + $0x38] sm:$0xf]
    %v233 = vld [vmem:[#allocation5 + $0x3c] sm:$0xf]
    %v234 = vld [vmem:[%s6] sm:$0x1]
    %v236 = vperm.slane %v234, 0
    %v254 = vunpack.c.l.b16 %v218
    %v255 = vunpack.c.l.b16 %v219
    %v256 = vunpack.c.l.b16 %v220
    %v257 = vunpack.c.l.b16 %v221
    %v258 = vunpack.c.l.b16 %v222
    %v259 = vunpack.c.l.b16 %v223
    %v260 = vunpack.c.l.b16 %v224
    %v261 = vunpack.c.l.b16 %v225
    %v262 = vunpack.c.l.b16 %v226
    %v263 = vunpack.c.l.b16 %v227
    %v264 = vunpack.c.l.b16 %v228
    %v265 = vunpack.c.l.b16 %v229
    %v266 = vunpack.c.l.b16 %v230
    %v267 = vunpack.c.l.b16 %v231
    %v268 = vunpack.c.l.b16 %v232
    %v269 = vunpack.c.l.b16 %v233
    %v270 = vpack.c.b16 %v255, %v254
    %v271 = vpack.c.b16 %v257, %v256
    %v272 = vpack.c.b16 %v259, %v258
    %v273 = vpack.c.b16 %v261, %v260
    %v274 = vpack.c.b16 %v263, %v262
    %v275 = vpack.c.b16 %v265, %v264
    %v276 = vpack.c.b16 %v267, %v266
    %v277 = vpack.c.b16 %v269, %v268
    %286 = vmatpush.bf16.msra.mxu0 %v277
    %287 = vmatpush.bf16.msra.mxu0 %v276
    %288 = vmatpush.bf16.msra.mxu0 %v275
    %289 = vmatpush.bf16.msra.mxu0 %v274
    %290 = vmatpush.bf16.msra.mxu0 %v273
    %291 = vmatpush.bf16.msra.mxu0 %v272
    %292 = vmatpush.bf16.msra.mxu0 %v271
    %293 = vmatpush.bf16.msra.mxu0 %v270
    %294 = vmatmul.bf16.gmra.mxu0 %v217
    %v295 = vpop.f32.mrf.mxu0
    %v296 = vadd.f32 %v236, %v295
    %v297 = vpop.f32.mrf.mxu0
    %v298 = vadd.f32 %v236, %v297
    %299 = vdwg.mxu0
    %vm300 = vcmp.gt.f32.partialorder %v296, 0.0
    %vm301 = vcmp.gt.f32.partialorder %v298, 0.0
    %v302 = vmul.f32 %v296, 0.01
    %v303 = vmul.f32 %v298, 0.01
    %v304 = vsel %vm300, %v296, %v302
    %v305 = vsel %vm301, %v298, %v303
    %v306 = vpack.c.bf16 %v305, %v304
    %v307 = vld [vmem:[#allocation7] sm:$0xf]
    %v308 = vld [vmem:[#allocation7 + $0x4] sm:$0xf]
    %v309 = vld [vmem:[#allocation7 + $0x8] sm:$0xf]
    %v310 = vld [vmem:[#allocation7 + $0xc] sm:$0xf]
    %v311 = vld [vmem:[#allocation7 + $0x10] sm:$0xf]
    %v312 = vld [vmem:[#allocation7 + $0x14] sm:$0xf]
    %v313 = vld [vmem:[#allocation7 + $0x18] sm:$0xf]
    %v314 = vld [vmem:[#allocation7 + $0x1c] sm:$0xf]
    %v315 = vld [vmem:[#allocation7 + $0x20] sm:$0xf]
    %v316 = vld [vmem:[#allocation7 + $0x24] sm:$0xf]
    %v317 = vld [vmem:[#allocation7 + $0x28] sm:$0xf]
    %v318 = vld [vmem:[#allocation7 + $0x2c] sm:$0xf]
    %v319 = vld [vmem:[#allocation7 + $0x30] sm:$0xf]
    %v320 = vld [vmem:[#allocation7 + $0x34] sm:$0xf]
    %v321 = vld [vmem:[#allocation7 + $0x38] sm:$0xf]
    %v322 = vld [vmem:[#allocation7 + $0x3c] sm:$0xf]
    %v323 = vld [vmem:[%s8] sm:$0x1]
    %v325 = vperm.slane %v323, 0
    %v343 = vunpack.c.l.b16 %v307
    %v344 = vunpack.c.l.b16 %v308
    %v345 = vunpack.c.l.b16 %v309
    %v346 = vunpack.c.l.b16 %v310
    %v347 = vunpack.c.l.b16 %v311
    %v348 = vunpack.c.l.b16 %v312
    %v349 = vunpack.c.l.b16 %v313
    %v350 = vunpack.c.l.b16 %v314
    %v351 = vunpack.c.l.b16 %v315
    %v352 = vunpack.c.l.b16 %v316
    %v353 = vunpack.c.l.b16 %v317
    %v354 = vunpack.c.l.b16 %v318
    %v355 = vunpack.c.l.b16 %v319
    %v356 = vunpack.c.l.b16 %v320
    %v357 = vunpack.c.l.b16 %v321
    %v358 = vunpack.c.l.b16 %v322
    %v359 = vpack.c.b16 %v344, %v343
    %v360 = vpack.c.b16 %v346, %v345
    %v361 = vpack.c.b16 %v348, %v347
    %v362 = vpack.c.b16 %v350, %v349
    %v363 = vpack.c.b16 %v352, %v351
    %v364 = vpack.c.b16 %v354, %v353
    %v365 = vpack.c.b16 %v356, %v355
    %v366 = vpack.c.b16 %v358, %v357
    %375 = vmatpush.bf16.msra.mxu0 %v366
    %376 = vmatpush.bf16.msra.mxu0 %v365
    %377 = vmatpush.bf16.msra.mxu0 %v364
    %378 = vmatpush.bf16.msra.mxu0 %v363
    %379 = vmatpush.bf16.msra.mxu0 %v362
    %380 = vmatpush.bf16.msra.mxu0 %v361
    %381 = vmatpush.bf16.msra.mxu0 %v360
    %382 = vmatpush.bf16.msra.mxu0 %v359
    %383 = vmatmul.bf16.gmra.mxu0 %v306
    %v384 = vpop.f32.mrf.mxu0
    %v385 = vadd.f32 %v325, %v384
    %v386 = vpop.f32.mrf.mxu0
    %v387 = vadd.f32 %v325, %v386
    %388 = vdwg.mxu0
    %389 = vmax.xlane.f32.xlu0 %v385
    %v390 = vpop.xlane.xlu0 %389
    %391 = vmax.xlane.f32.xlu0 %v387
    %v392 = vpop.xlane.xlu0 %391
    %v393 = vsub.f32 %v385, %v390
    %v394 = vsub.f32 %v387, %v392
    %v395 = vmul.f32 %v393, 1.442695
    %v396 = vpow.pop %v395
    %v397 = vmul.f32 %v394, 1.442695
    %v398 = vpow.pop %v397
    %399 = vadd.xlane.f32.xlu0 %v396
    %v400 = vpop.xlane.xlu0 %399
    %401 = vadd.xlane.f32.xlu0 %v398
    %v402 = vpop.xlane.xlu0 %401
    %v403 = vrcp.pop %v400
    %v404 = vrcp.pop %v402
    %v405 = vmul.f32 %v396, %v403
    %v406 = vmul.f32 %v398, %v404
    %v407 = vpack.c.bf16 %v405, %v405
    %v408 = vpack.c.bf16 %v406, %v406
    %409 = vst [vmem:[#allocation8] sm:$0xf] %v407
    %410 = vst [vmem:[#allocation8 + $0x4] sm:$0xf] %v408
    // Predicated region
    $region50: #{_lambda_.1} parent=1 // pred_check
      _
    $region51: #{_lambda_.1} parent=1 // pred_check_branch
      %412 = sbr.rel (0) target = $region53
    $region52: #{_lambda_.1} parent=1 // pred_region
      %414 = vsyncadd [#allocation4], 0
      %s415 = sshll.u32 [#allocation8], 4
      %s416 = int_to_ptr.vmem [resolvable:$true] %s415
      %s417 = sshll.u32 %s9, 4
      %s418 = int_to_ptr.hbm [resolvable:$true] %s417
      %423 = dma.vmem_to_hbm [thread:$0]  %s416, 128, %s418, [#allocation4], 64, 64, 4
    $region53: #{_lambda_.1} parent=1 // pred_fallthru
      _
    // Predicated region
    $region54: #{_lambda_.1} parent=1 // pred_check
      _
    $region55: #{_lambda_.1} parent=1 // pred_check_branch
      %425 = sbr.rel (0) target = $region57
    $region56: #{_lambda_.1} parent=1 // pred_region
      %427 = dma.done [#allocation4], 128
    $region57: #{_lambda_.1} parent=1 // pred_fallthru
      _
    %428 = vsyncpa [#allocation3], 1
    %429 = vsyncpa [#allocation6], 1
    %430 = vsyncpa [#allocation4], 1

</llo_original>
